<compile_context>
chip_gen: v6e
topology: v6e:2x2x1
jax: 0.10.0
libtpu: 0.0.40
codegen_flags: <defaults>
</compile_context>

<pallas_src>
import functools

import jax
import jax.numpy as jnp
from jax import lax
from jax.experimental import pallas as pl
from jax.experimental.pallas import tpu as pltpu


# (in_features, out_features) for the six nn.Linear layers.
LAYER_DIMS = [(10, 32), (32, 16), (16, 3), (3, 16), (16, 32), (32, 10)]
N_LAYERS = len(LAYER_DIMS)
PAD = 32           # feature dims padded to 32 inside the parameter slabs
IN_F = 10
OUT_F = 10

# Per-layer contraction (K) and output (M) sizes actually used by the kernel:
# the real dims rounded up to 8 sublanes, chained so layer l's M feeds layer
# l+1's K.  Padded rows/cols are zero and stay exactly zero through ReLU.
IN_P = [10, 32, 16, 8, 16, 32]
OUT_P = [32, 16, 8, 16, 32, 10]


# ----------------------------------------------------------------------------
# Kernel
# ----------------------------------------------------------------------------
def autoencoder_kernel(x_ref, w_ref, b_ref, o_ref, *, chunk, use_bf16):
    """Feature-major forward pass over one batch tile.

    x_ref : [10, TB]     input tile (batch on lanes)
    w_ref : [6, 32, 32]  W_l in PyTorch-native [out, in] layout, zero padded
    b_ref : [6, 32, 1]   b_l, zero padded
    o_ref : [10, TB]     sigmoid output tile
    """
    tb = x_ref.shape[1]
    n_chunks = tb // chunk

    # Hoist the (tiny) weight/bias slices out of the chunk loop; static slices
    # are free and these become loop constants held in vregs.
    ws, bs = [], []
    for l in range(N_LAYERS):
        w = w_ref[l, :OUT_P[l], :IN_P[l]]
        if use_bf16:
            w = w.astype(jnp.bfloat16)
        ws.append(w)
        bs.append(b_ref[l, :OUT_P[l], :])

    def process(start):
        h = x_ref[:, pl.ds(start, chunk)]                       # [10, C] f32
        for l in range(N_LAYERS):
            lhs = h.astype(jnp.bfloat16) if use_bf16 else h
            z = jnp.dot(ws[l], lhs,
                        preferred_element_type=jnp.float32) + bs[l]
            if l < N_LAYERS - 1:
                h = jnp.maximum(z, 0.0)                          # [OUT_P[l], C]
            else:
                # Exact sigmoid (exp runs on the EUP; the divide is cheap and
                # keeps us well inside the validation tolerance).
                h = 1.0 / (1.0 + jnp.exp(-z))                    # [10, C]
        o_ref[:, pl.ds(start, chunk)] = h.astype(o_ref.dtype)

    if n_chunks == 1:
        process(0)
    else:
        def body(c, carry):
            start = pl.multiple_of(c * chunk, chunk)
            process(start)
            return carry
        lax.fori_loop(0, n_chunks, body, 0)


# ----------------------------------------------------------------------------
# Parameter packing & wrapper
# ----------------------------------------------------------------------------
def pack_params(params):
    """Pack 6 (W [out,in], b [out]) pairs into two zero-padded slabs."""
    w_slab = jnp.zeros((N_LAYERS, PAD, PAD), jnp.float32)
    b_slab = jnp.zeros((N_LAYERS, PAD, 1), jnp.float32)
    for l, (w, b) in enumerate(params):
        out_f, in_f = w.shape
        w_slab = w_slab.at[l, :out_f, :in_f].set(w)
        b_slab = b_slab.at[l, :out_f, 0].set(b)
    return w_slab, b_slab


def _device_kind():
    try:
        return jax.devices()[0].device_kind.lower()
    except Exception:
        return ""


def _wants_bf16(kind):
    # bf16 matmul operands only where the VPU is bf16-native (v6e / v7x).
    return ("v6" in kind) or ("v7" in kind) or ("tpu7" in kind)


def _is_dual_core(kind):
    # v7x has two TensorCores per chip; keep >=2 grid steps so both get work.
    return ("v7" in kind) or ("tpu7" in kind)


def _round_up(v, m):
    return ((v + m - 1) // m) * m


def _choose_tb(batch, *, two_cores, requested=8192, cap=16384):
    """Batch tile: big enough to amortize per-step overhead, small enough for
    the v5e 16 MiB scoped-VMEM default, and (on v7x) leaving >=2 grid steps."""
    b128 = _round_up(max(batch, 1), 128)
    tb = min(requested, cap, b128)
    if two_cores and b128 >= 256:
        tb = min(tb, _round_up(b128 // 2, 128))
    return max(tb, 128)


def _choose_chunk(tb):
    for c in (512, 256, 128):
        if tb % c == 0:
            return c
    return tb


def autoencoder_forward(x, w_slab, b_slab, *, tb=None):
    """x: [B, 10] float32 -> [B, 10] float32 (sigmoid reconstruction)."""
    B, F = x.shape
    assert F == IN_F

    kind = _device_kind()
    use_bf16 = _wants_bf16(kind)
    if tb is None:
        tb = _choose_tb(B, two_cores=_is_dual_core(kind))
    tb = _round_up(tb, 128)

    n_tiles = pl.cdiv(B, tb)
    b_pad = n_tiles * tb
    chunk = _choose_chunk(tb)

    # Layout plumbing: feature-major so the batch maps to the 128-lane axis.
    # Pad only when needed (skips a full HBM copy when B % tb == 0).
    x_fm = x.T                                                  # [10, B]
    if b_pad != B:
        x_fm = jnp.pad(x_fm, ((0, 0), (0, b_pad - B)))          # [10, B_pad]

    kernel = functools.partial(autoencoder_kernel, chunk=chunk,
                               use_bf16=use_bf16)

    out_fm = pl.pallas_call(
        kernel,
        out_shape=jax.ShapeDtypeStruct((OUT_F, b_pad), jnp.float32),
        grid=(n_tiles,),
        in_specs=[
            pl.BlockSpec((IN_F, tb), lambda i: (0, i)),         # streamed x tile
            pl.BlockSpec(w_slab.shape, lambda i: (0, 0, 0)),    # resident weights
            pl.BlockSpec(b_slab.shape, lambda i: (0, 0, 0)),    # resident biases
        ],
        out_specs=pl.BlockSpec((OUT_F, tb), lambda i: (0, i)),
        compiler_params=pltpu.CompilerParams(
            dimension_semantics=("parallel",)),                 # megacore on v7x
    )(x_fm, w_slab, b_slab)

    out_fm = out_fm if b_pad == B else out_fm[:, :B]
    return out_fm.T                                             # back to [B, 10]


# ----------------------------------------------------------------------------
# Reference + demo
# ----------------------------------------------------------------------------
def init_params(key):
    """PyTorch-native init: W [out, in], b [out], U(-1/sqrt(in), 1/sqrt(in))."""
    params = []
    for i, (fan_in, fan_out) in enumerate(LAYER_DIMS):
        kw, kb = jax.random.split(jax.random.fold_in(key, i))
        bound = 1.0 / (fan_in ** 0.5)
        w = jax.random.uniform(kw, (fan_out, fan_in), jnp.float32,
                               minval=-bound, maxval=bound)
        b = jax.random.uniform(kb, (fan_out,), jnp.float32,
                               minval=-bound, maxval=bound)
        params.append((w, b))
    return params


def reference_forward(x, params):
    """Pure-JAX reference (exact sigmoid, highest-precision matmuls)."""
    h = x
    for i, (w, b) in enumerate(params):
        h = jnp.dot(h, w.T, precision=jax.lax.Precision.HIGHEST) + b
        if i < N_LAYERS - 1:
            h = jnp.maximum(h, 0.0)
        else:
            h = 1.0 / (1.0 + jnp.exp(-h))
    return h


if __name__ == "__main__":
    key = jax.random.PRNGKey(0)
    pkey, xkey = jax.random.split(key)

    params = init_params(pkey)
    w_slab, b_slab = pack_params(params)

    batch = 1000                      # not a multiple of 128 -> exercises padding
    x = jax.random.uniform(xkey, (batch, IN_F), jnp.float32)   # inputs in [0, 1]

    out = autoencoder_forward(x, w_slab, b_slab)
    jax.block_until_ready(out)

    ref = reference_forward(x, params)
    assert out.shape == (batch, OUT_F)

    # Tolerance: tight for the all-f32 path; looser if bf16 matmul operands
    # were used (v6e / v7x), which is still far smaller than any real bug.
    tol = 2e-2 if _wants_bf16(_device_kind()) else 5e-3
    err = float(jnp.max(jnp.abs(out - ref)))
    assert jnp.allclose(out, ref, atol=tol, rtol=tol), (
        f"mismatch vs reference, max abs err = {err}")

    print("KERNEL_OK")
</pallas_src>

<mosaic_0001>
module attributes {stable_mosaic.version = 11 : i64} {
  func.func @autoencoder_kernel(%arg0: i32, %arg1: memref<10x1024xf32, #tpu.memory_space<vmem>>, %arg2: memref<6x32x32xf32, #tpu.memory_space<vmem>>, %arg3: memref<6x32x1xf32, #tpu.memory_space<vmem>>, %arg4: memref<10x1024xf32, #tpu.memory_space<vmem>>) attributes {dimension_semantics = [#tpu.dimension_semantics<parallel>], iteration_bounds = array<i64: 1>, scalar_prefetch = 0 : i64, scratch_operands = 0 : i64, tpu.core_type = #tpu.core_type<tc>, window_params = [{transform_indices = @transform_0, window_bounds = array<i64: 10, 1024>}, {pipeline_mode = #tpu.pipeline_mode<synchronous>, transform_indices = @transform_1, window_bounds = array<i64: 6, 32, 32>}, {pipeline_mode = #tpu.pipeline_mode<synchronous>, transform_indices = @transform_2, window_bounds = array<i64: 6, 32, 1>}, {transform_indices = @transform_3, window_bounds = array<i64: 10, 1024>}]} {
    %c0 = arith.constant 0 : index
    %c0_0 = arith.constant 0 : index
    %c0_1 = arith.constant 0 : index
    %0 = vector.load %arg2[%c0, %c0_0, %c0_1] : memref<6x32x32xf32, #tpu.memory_space<vmem>>, vector<1x32x10xf32>
    %1 = vector.shape_cast %0 : vector<1x32x10xf32> to vector<32x10xf32>
    %c0_2 = arith.constant 0 : index
    %c0_3 = arith.constant 0 : index
    %c0_4 = arith.constant 0 : index
    %2 = vector.load %arg3[%c0_2, %c0_3, %c0_4] : memref<6x32x1xf32, #tpu.memory_space<vmem>>, vector<1x32x1xf32>
    %3 = vector.shape_cast %2 : vector<1x32x1xf32> to vector<32x1xf32>
    %c1 = arith.constant 1 : index
    %c0_5 = arith.constant 0 : index
    %c0_6 = arith.constant 0 : index
    %4 = vector.load %arg2[%c1, %c0_5, %c0_6] : memref<6x32x32xf32, #tpu.memory_space<vmem>>, vector<1x16x32xf32>
    %5 = vector.shape_cast %4 : vector<1x16x32xf32> to vector<16x32xf32>
    %c1_7 = arith.constant 1 : index
    %c0_8 = arith.constant 0 : index
    %c0_9 = arith.constant 0 : index
    %6 = vector.load %arg3[%c1_7, %c0_8, %c0_9] : memref<6x32x1xf32, #tpu.memory_space<vmem>>, vector<1x16x1xf32>
    %7 = vector.shape_cast %6 : vector<1x16x1xf32> to vector<16x1xf32>
    %c2 = arith.constant 2 : index
    %c0_10 = arith.constant 0 : index
    %c0_11 = arith.constant 0 : index
    %8 = vector.load %arg2[%c2, %c0_10, %c0_11] : memref<6x32x32xf32, #tpu.memory_space<vmem>>, vector<1x8x16xf32>
    %9 = vector.shape_cast %8 : vector<1x8x16xf32> to vector<8x16xf32>
    %c2_12 = arith.constant 2 : index
    %c0_13 = arith.constant 0 : index
    %c0_14 = arith.constant 0 : index
    %10 = vector.load %arg3[%c2_12, %c0_13, %c0_14] : memref<6x32x1xf32, #tpu.memory_space<vmem>>, vector<1x8x1xf32>
    %11 = vector.shape_cast %10 : vector<1x8x1xf32> to vector<8x1xf32>
    %c3 = arith.constant 3 : index
    %c0_15 = arith.constant 0 : index
    %c0_16 = arith.constant 0 : index
    %12 = vector.load %arg2[%c3, %c0_15, %c0_16] : memref<6x32x32xf32, #tpu.memory_space<vmem>>, vector<1x16x8xf32>
    %13 = vector.shape_cast %12 : vector<1x16x8xf32> to vector<16x8xf32>
    %c3_17 = arith.constant 3 : index
    %c0_18 = arith.constant 0 : index
    %c0_19 = arith.constant 0 : index
    %14 = vector.load %arg3[%c3_17, %c0_18, %c0_19] : memref<6x32x1xf32, #tpu.memory_space<vmem>>, vector<1x16x1xf32>
    %15 = vector.shape_cast %14 : vector<1x16x1xf32> to vector<16x1xf32>
    %c4 = arith.constant 4 : index
    %c0_20 = arith.constant 0 : index
    %c0_21 = arith.constant 0 : index
    %16 = vector.load %arg2[%c4, %c0_20, %c0_21] : memref<6x32x32xf32, #tpu.memory_space<vmem>>, vector<1x32x16xf32>
    %17 = vector.shape_cast %16 : vector<1x32x16xf32> to vector<32x16xf32>
    %c4_22 = arith.constant 4 : index
    %c0_23 = arith.constant 0 : index
    %c0_24 = arith.constant 0 : index
    %18 = vector.load %arg3[%c4_22, %c0_23, %c0_24] : memref<6x32x1xf32, #tpu.memory_space<vmem>>, vector<1x32x1xf32>
    %19 = vector.shape_cast %18 : vector<1x32x1xf32> to vector<32x1xf32>
    %c5 = arith.constant 5 : index
    %c0_25 = arith.constant 0 : index
    %c0_26 = arith.constant 0 : index
    %20 = vector.load %arg2[%c5, %c0_25, %c0_26] : memref<6x32x32xf32, #tpu.memory_space<vmem>>, vector<1x10x32xf32>
    %21 = vector.shape_cast %20 : vector<1x10x32xf32> to vector<10x32xf32>
    %c5_27 = arith.constant 5 : index
    %c0_28 = arith.constant 0 : index
    %c0_29 = arith.constant 0 : index
    %22 = vector.load %arg3[%c5_27, %c0_28, %c0_29] : memref<6x32x1xf32, #tpu.memory_space<vmem>>, vector<1x10x1xf32>
    %23 = vector.shape_cast %22 : vector<1x10x1xf32> to vector<10x1xf32>
    %c0_i32 = arith.constant 0 : i32
    %c2_i32 = arith.constant 2 : i32
    %24 = arith.addi %c0_i32, %c2_i32 : i32
    %c1_i32 = arith.constant 1 : i32
    scf.for %arg5 = %c0_i32 to %24 step %c1_i32  : i32 {
      %c512_i32 = arith.constant 512 : i32
      %25 = arith.muli %arg5, %c512_i32 : i32
      %26 = tpu.assume_multiple %25, 512 : i32
      %c0_31 = arith.constant 0 : index
      %27 = arith.index_cast %26 : i32 to index
      %28 = vector.load %arg1[%c0_31, %27] : memref<10x1024xf32, #tpu.memory_space<vmem>>, vector<10x512xf32>
      %cst = arith.constant dense<0.000000e+00> : vector<32x512xf32>
      %29 = tpu.matmul %1, %28, %cst {dimension_numbers = #tpu.dot_dimension_numbers<[1], [0], [0], [1], [0, 0, 1, 1], [], []>} : vector<32x10xf32>, vector<10x512xf32>, vector<32x512xf32> -> vector<32x512xf32>
      %30 = vector.broadcast %3 : vector<32x1xf32> to vector<32x512xf32>
      %31 = arith.addf %29, %30 : vector<32x512xf32>
      %cst_32 = arith.constant 0.000000e+00 : f32
      %32 = vector.broadcast %cst_32 : f32 to vector<32x512xf32>
      %33 = arith.maximumf %31, %32 : vector<32x512xf32>
      %cst_33 = arith.constant dense<0.000000e+00> : vector<16x512xf32>
      %34 = tpu.matmul %5, %33, %cst_33 {dimension_numbers = #tpu.dot_dimension_numbers<[1], [0], [0], [1], [0, 0, 1, 1], [], []>} : vector<16x32xf32>, vector<32x512xf32>, vector<16x512xf32> -> vector<16x512xf32>
      %35 = vector.broadcast %7 : vector<16x1xf32> to vector<16x512xf32>
      %36 = arith.addf %34, %35 : vector<16x512xf32>
      %cst_34 = arith.constant 0.000000e+00 : f32
      %37 = vector.broadcast %cst_34 : f32 to vector<16x512xf32>
      %38 = arith.maximumf %36, %37 : vector<16x512xf32>
      %cst_35 = arith.constant dense<0.000000e+00> : vector<8x512xf32>
      %39 = tpu.matmul %9, %38, %cst_35 {dimension_numbers = #tpu.dot_dimension_numbers<[1], [0], [0], [1], [0, 0, 1, 1], [], []>} : vector<8x16xf32>, vector<16x512xf32>, vector<8x512xf32> -> vector<8x512xf32>
      %40 = vector.broadcast %11 : vector<8x1xf32> to vector<8x512xf32>
      %41 = arith.addf %39, %40 : vector<8x512xf32>
      %cst_36 = arith.constant 0.000000e+00 : f32
      %42 = vector.broadcast %cst_36 : f32 to vector<8x512xf32>
      %43 = arith.maximumf %41, %42 : vector<8x512xf32>
      %cst_37 = arith.constant dense<0.000000e+00> : vector<16x512xf32>
      %44 = tpu.matmul %13, %43, %cst_37 {dimension_numbers = #tpu.dot_dimension_numbers<[1], [0], [0], [1], [0, 0, 1, 1], [], []>} : vector<16x8xf32>, vector<8x512xf32>, vector<16x512xf32> -> vector<16x512xf32>
      %45 = vector.broadcast %15 : vector<16x1xf32> to vector<16x512xf32>
      %46 = arith.addf %44, %45 : vector<16x512xf32>
      %cst_38 = arith.constant 0.000000e+00 : f32
      %47 = vector.broadcast %cst_38 : f32 to vector<16x512xf32>
      %48 = arith.maximumf %46, %47 : vector<16x512xf32>
      %cst_39 = arith.constant dense<0.000000e+00> : vector<32x512xf32>
      %49 = tpu.matmul %17, %48, %cst_39 {dimension_numbers = #tpu.dot_dimension_numbers<[1], [0], [0], [1], [0, 0, 1, 1], [], []>} : vector<32x16xf32>, vector<16x512xf32>, vector<32x512xf32> -> vector<32x512xf32>
      %50 = vector.broadcast %19 : vector<32x1xf32> to vector<32x512xf32>
      %51 = arith.addf %49, %50 : vector<32x512xf32>
      %cst_40 = arith.constant 0.000000e+00 : f32
      %52 = vector.broadcast %cst_40 : f32 to vector<32x512xf32>
      %53 = arith.maximumf %51, %52 : vector<32x512xf32>
      %cst_41 = arith.constant dense<0.000000e+00> : vector<10x512xf32>
      %54 = tpu.matmul %21, %53, %cst_41 {dimension_numbers = #tpu.dot_dimension_numbers<[1], [0], [0], [1], [0, 0, 1, 1], [], []>} : vector<10x32xf32>, vector<32x512xf32>, vector<10x512xf32> -> vector<10x512xf32>
      %55 = vector.broadcast %23 : vector<10x1xf32> to vector<10x512xf32>
      %56 = arith.addf %54, %55 : vector<10x512xf32>
      %cst_42 = arith.constant 0.000000e+00 : f32
      %57 = vector.broadcast %cst_42 : f32 to vector<10x512xf32>
      %58 = arith.subf %57, %56 : vector<10x512xf32>
      %59 = math.exp %58 : vector<10x512xf32>
      %cst_43 = arith.constant 1.000000e+00 : f32
      %60 = vector.broadcast %cst_43 : f32 to vector<10x512xf32>
      %61 = arith.addf %60, %59 : vector<10x512xf32>
      %cst_44 = arith.constant 1.000000e+00 : f32
      %62 = vector.broadcast %cst_44 : f32 to vector<10x512xf32>
      %63 = arith.divf %62, %61 : vector<10x512xf32>
      %c0_45 = arith.constant 0 : index
      %64 = arith.index_cast %26 : i32 to index
      %65 = vector.load %arg4[%c0_45, %64] : memref<10x1024xf32, #tpu.memory_space<vmem>>, vector<10x512xf32>
      tpu.vector_store %arg4[%c0_45, %64], %63 {strides = array<i32>} : memref<10x1024xf32, #tpu.memory_space<vmem>>, vector<10x512xf32>,
    }
    %c2_i32_30 = arith.constant 2 : i32
    return
  }
  func.func @transform_0(%arg0: i32) -> (i32, i32) {
    %c0_i32 = arith.constant 0 : i32
    %c0_i32_0 = arith.constant 0 : i32
    return %c0_i32, %arg0 : i32, i32
  }
  func.func @transform_1(%arg0: i32) -> (i32, i32, i32) {
    %c0_i32 = arith.constant 0 : i32
    %c0_i32_0 = arith.constant 0 : i32
    %c0_i32_1 = arith.constant 0 : i32
    %c0_i32_2 = arith.constant 0 : i32
    return %c0_i32, %c0_i32_0, %c0_i32_1 : i32, i32, i32
  }
  func.func @transform_2(%arg0: i32) -> (i32, i32, i32) {
    %c0_i32 = arith.constant 0 : i32
    %c0_i32_0 = arith.constant 0 : i32
    %c0_i32_1 = arith.constant 0 : i32
    %c0_i32_2 = arith.constant 0 : i32
    return %c0_i32, %c0_i32_0, %c0_i32_1 : i32, i32, i32
  }
  func.func @transform_3(%arg0: i32) -> (i32, i32) {
    %c0_i32 = arith.constant 0 : i32
    %c0_i32_0 = arith.constant 0 : i32
    return %c0_i32, %arg0 : i32, i32
  }
}

</mosaic_0001>

<llo_original>
// kernel: tpu_custom_call.1
$region0: #{tpu_custom_call.1}
  #allocation0 [shape = 'u32[]', space=smem, size = 0x4, offset = 0x4, fixed_abs, tag = 'smem constant byte address 0x4 - core index']
  #allocation1 [shape = 'u32[144,128]{1,0:T(1,128)}', space=vmem, size = 0x12000, scoped, tag = 'internal scratch']
  %s0 = inlined_call_operand.hbm [shape: f32[10,1024], index: 0, kind: input, shape index: {}]
  %s1 = inlined_call_operand.vmem [shape: f32[6,32,32], index: 1, kind: input, shape index: {}]
  %s2 = inlined_call_operand.vmem [shape: f32[6,32,1], index: 2, kind: input, shape index: {}]
  %s3 = inlined_call_operand.hbm [shape: f32[10,1024], index: 3, kind: output, shape index: {}]
  %s4 = sld [smem:[#allocation0]]
  $region33: #{tpu_custom_call.1} parent=0
    _
  %s6 = ssub.s32 1, %s4
  %s7 = scalar_select 0, %s6, %s4
  $region1: #{tpu_custom_call.1} parent=0
    #allocation2 [shape = 'u8[65536]{0}', space=vmem, size = 0x10000, scoped, tag = 'input window, operand 0, single buffered']
    #allocation3 [shape = 's32[1]{0}', space=sflag, size = 0x4, scoped, tag = 'scoped memory for tpu_custom_call.1']
    #allocation4 [shape = 's32[1]{0}', space=sflag, size = 0x4, scoped, tag = 'scoped memory for tpu_custom_call.1']
    #allocation5 [shape = 'u8[65536]{0}', space=vmem, size = 0x10000, scoped, tag = 'output window, operand 0, single buffered']
    %8 = vsyncpa [#allocation3], 0
    %9 = vsyncpa [#allocation4], 0
    // Predicated region
    $region2: #{tpu_custom_call.1} parent=1 // pred_check
      _
    $region3: #{tpu_custom_call.1} parent=1 // pred_check_branch
      %11 = sbr.rel (0) target = $region5
    $region4: #{tpu_custom_call.1} parent=1 // pred_region
      %s13 = ssub.s32 2048, 2048
      %14 = vsyncadd [#allocation3], %s13
      %s15 = sshll.u32 [#allocation2], 4
      %s16 = int_to_ptr.vmem [resolvable:$true] %s15
      %21 = dma.hbm_to_vmem [thread:$0]  %s0, 2048, %s16, [#allocation3], 1024, 1024, 64
    $region5: #{tpu_custom_call.1} parent=1 // pred_fallthru
      _
    // Predicated region
    $region6: #{tpu_custom_call.1} parent=1 // pred_check
      _
    $region7: #{tpu_custom_call.1} parent=1 // pred_check_branch
      %23 = sbr.rel (0) target = $region9
    $region8: #{tpu_custom_call.1} parent=1 // pred_region
      _
    $region9: #{tpu_custom_call.1} parent=1 // pred_fallthru
      _
    // Predicated region
    $region10: #{tpu_custom_call.1} parent=1 // pred_check
      _
    $region11: #{tpu_custom_call.1} parent=1 // pred_check_branch
      %25 = sbr.rel (0) target = $region13
    $region12: #{tpu_custom_call.1} parent=1 // pred_region
      _
    $region13: #{tpu_custom_call.1} parent=1 // pred_fallthru
      _
    // Predicated region
    $region14: #{tpu_custom_call.1} parent=1 // pred_check
      _
    $region15: #{tpu_custom_call.1} parent=1 // pred_check_branch
      %27 = sbr.rel (0) target = $region17
    $region16: #{tpu_custom_call.1} parent=1 // pred_region
      %28 = dma.done [#allocation3], 2048
    $region17: #{tpu_custom_call.1} parent=1 // pred_fallthru
      _
    %v29 = vld [vmem:[%s1] sm:$0xff]
    %v30 = vld [vmem:[%s1 + $0x8] sm:$0xff]
    %v31 = vld [vmem:[%s1 + $0x10] sm:$0xff]
    %v32 = vld [vmem:[%s1 + $0x18] sm:$0xff]
    %v33 = vld [vmem:[%s2] sm:$0xff]
    %v34 = vld [vmem:[%s2 + $0x8] sm:$0xff]
    %v35 = vld [vmem:[%s2 + $0x10] sm:$0xff]
    %v36 = vld [vmem:[%s2 + $0x18] sm:$0xff]
    %s37 = scalar_lea.vmem %s1, 32
    %v38 = vld [vmem:[%s37] sm:$0xff]
    %v39 = vld [vmem:[%s37 + $0x8] sm:$0xff]
    %s40 = scalar_lea.vmem %s2, 32
    %v41 = vld [vmem:[%s40] sm:$0xff]
    %v42 = vld [vmem:[%s40 + $0x8] sm:$0xff]
    %s43 = scalar_lea.vmem %s1, 64
    %v44 = vld [vmem:[%s43] sm:$0xff]
    %s45 = scalar_lea.vmem %s2, 64
    %v46 = vld [vmem:[%s45] sm:$0xff]
    %s47 = scalar_lea.vmem %s1, 96
    %v48 = vld [vmem:[%s47] sm:$0xff]
    %v49 = vld [vmem:[%s47 + $0x8] sm:$0xff]
    %s50 = scalar_lea.vmem %s2, 96
    %v51 = vld [vmem:[%s50] sm:$0xff]
    %v52 = vld [vmem:[%s50 + $0x8] sm:$0xff]
    %s53 = scalar_lea.vmem %s1, 128
    %v54 = vld [vmem:[%s53] sm:$0xff]
    %v55 = vld [vmem:[%s53 + $0x8] sm:$0xff]
    %v56 = vld [vmem:[%s53 + $0x10] sm:$0xff]
    %v57 = vld [vmem:[%s53 + $0x18] sm:$0xff]
    %s58 = scalar_lea.vmem %s2, 128
    %v59 = vld [vmem:[%s58] sm:$0xff]
    %v60 = vld [vmem:[%s58 + $0x8] sm:$0xff]
    %v61 = vld [vmem:[%s58 + $0x10] sm:$0xff]
    %v62 = vld [vmem:[%s58 + $0x18] sm:$0xff]
    %s63 = scalar_lea.vmem %s1, 160
    %v64 = vld [vmem:[%s63] sm:$0xff]
    %v65 = vld [vmem:[%s63 + $0x8] sm:$0x3]
    %s66 = scalar_lea.vmem %s2, 160
    %v67 = vld [vmem:[%s66] sm:$0xff]
    %v68 = vld [vmem:[%s66 + $0x8] sm:$0x3]
    loop: start=0, step=1, limit=2
    $region18: #{tpu_custom_call.1} parent=1 // loop_pre_header
      _
    $region19: #{tpu_custom_call.1} parent=1 // loop_header
      %s70 = sphi 0, %s74
      %p71 = scmp.ge.s32.totalorder %s70, 2
    $region20: #{tpu_custom_call.1} parent=1 // loop_header_branch
      %73 = sbr.rel (%p71) target = $region24
    $region21: #{tpu_custom_call.1} parent=1 // loop_body
      %s75 = smul.u32 %s70, 512
      %s76 = sshra.s32 %s75, 7
      %s77 = sand.u32 %s75, 127
      %s78 = smul.addr %s76, 8
      %s79 = scalar_lea.vmem [#allocation2], %s78
      %v80 = vld [vmem:[%s79] sm:$0xff]
      %v81 = vld [vmem:[%s79 + $0x8] sm:$0xff]
      %v82 = vld [vmem:[%s79 + $0x10] sm:$0xff]
      %v83 = vld [vmem:[%s79 + $0x18] sm:$0xff]
      %v84 = vld [vmem:[%s79 + $0x40] sm:$0x3]
      %v85 = vld [vmem:[%s79 + $0x48] sm:$0x3]
      %v86 = vld [vmem:[%s79 + $0x50] sm:$0x3]
      %v87 = vld [vmem:[%s79 + $0x58] sm:$0x3]
      %89 = vset.pattern.permute.xlu0 0
      %90 = vperm.xlu0 %89, %v33
      %v91 = vpop.permute.xlu0 %90
      %94 = vset.pattern.permute.xlu0 0
      %95 = vperm.xlu0 %94, %v34
      %v96 = vpop.permute.xlu0 %95
      %99 = vset.pattern.permute.xlu0 0
      %100 = vperm.xlu0 %99, %v35
      %v101 = vpop.permute.xlu0 %100
      %104 = vset.pattern.permute.xlu0 0
      %105 = vperm.xlu0 %104, %v36
      %v106 = vpop.permute.xlu0 %105
      %vm108 = vcmask 80896
      %v110 = vsel %vm108, %v29, 0
      %v113 = vsel %vm108, %v30, 0
      %v116 = vsel %vm108, %v31, 0
      %v119 = vsel %vm108, %v32, 0
      %vm121 = vcmask 1041408
      %v123 = vsel %vm121, %v84, 0
      %v126 = vsel %vm121, %v85, 0
      %v129 = vsel %vm121, %v86, 0
      %v132 = vsel %vm121, %v87, 0
      %134 = vmatprep.subr.mxu0 0.0
      %135 = vmatpush1.msra.mxu0 0.0
      %136 = vmatprep.subr.mxu0 0.0
      %137 = vmatpush1.msra.mxu0 0.0
      %138 = vmatprep.subr.mxu0 0.0
      %139 = vmatpush1.msra.mxu0 0.0
      %140 = vmatprep.subr.mxu0 0.0
      %141 = vmatpush1.msra.mxu0 0.0
      %142 = vmatprep.subr.mxu0 0.0
      %143 = vmatpush1.msra.mxu0 0.0
      %144 = vmatprep.subr.mxu0 0.0
      %145 = vmatpush1.msra.mxu0 0.0
      %146 = vmatprep.subr.mxu0 0.0
      %147 = vmatpush1.msra.mxu0 0.0
      %148 = vmatprep.subr.mxu0 0.0
      %149 = vmatpush1.msra.mxu0 0.0
      %150 = vmatprep.subr.mxu0 0.0
      %151 = vmatpush1.msra.mxu0 0.0
      %152 = vmatprep.subr.mxu0 0.0
      %153 = vmatpush1.msra.mxu0 0.0
      %154 = vmatprep.subr.mxu0 0.0
      %155 = vmatpush1.msra.mxu0 0.0
      %156 = vmatprep.subr.mxu0 0.0
      %157 = vmatpush1.msra.mxu0 0.0
      %158 = vmatprep.subr.mxu0 0.0
      %159 = vmatpush1.msra.mxu0 0.0
      %160 = vmatprep.subr.mxu0 0.0
      %161 = vmatpush1.msra.mxu0 0.0
      %162 = vmatprep.subr.mxu0 %v126
      %163 = vmatpush1.msra.mxu0 %v123
      %164 = vmatprep.subr.mxu0 %v81
      %165 = vmatpush1.msra.mxu0 %v80
      %166 = vmatprep.subr.mxu0 0.0
      %167 = vmatpush2.msra.mxu0 0.0
      %168 = vmatprep.subr.mxu0 0.0
      %169 = vmatpush2.msra.mxu0 0.0
      %170 = vmatprep.subr.mxu0 0.0
      %171 = vmatpush2.msra.mxu0 0.0
      %172 = vmatprep.subr.mxu0 0.0
      %173 = vmatpush2.msra.mxu0 0.0
      %174 = vmatprep.subr.mxu0 0.0
      %175 = vmatpush2.msra.mxu0 0.0
      %176 = vmatprep.subr.mxu0 0.0
      %177 = vmatpush2.msra.mxu0 0.0
      %178 = vmatprep.subr.mxu0 0.0
      %179 = vmatpush2.msra.mxu0 0.0
      %180 = vmatprep.subr.mxu0 0.0
      %181 = vmatpush2.msra.mxu0 0.0
      %182 = vmatprep.subr.mxu0 0.0
      %183 = vmatpush2.msra.mxu0 0.0
      %184 = vmatprep.subr.mxu0 0.0
      %185 = vmatpush2.msra.mxu0 0.0
      %186 = vmatprep.subr.mxu0 0.0
      %187 = vmatpush2.msra.mxu0 0.0
      %188 = vmatprep.subr.mxu0 0.0
      %189 = vmatpush2.msra.mxu0 0.0
      %190 = vmatprep.subr.mxu0 0.0
      %191 = vmatpush2.msra.mxu0 0.0
      %192 = vmatprep.subr.mxu0 0.0
      %193 = vmatpush2.msra.mxu0 0.0
      %194 = vmatprep.subr.mxu0 0.0
      %195 = vmatpush2.msra.mxu0 0.0
      %196 = vmatprep.subr.mxu0 0.0
      %197 = vmatpush2.msra.mxu0 0.0
      %198 = vmatprep.mubr.f32.mxu0 0.0
      %199 = vmatmul.mubr.f32.gmra.mxu0 %v110
      %v200 = vpop.f32.mrf.mxu0
      %v201 = vadd.f32 %v91, %v200
      %v202 = vpop.f32.mrf.mxu0
      %v203 = vadd.f32 %v91, %v202
      %204 = vmatprep.mubr.f32.mxu0 0.0
      %205 = vmatmul.mubr.f32.gmra.mxu0 %v113
      %v206 = vpop.f32.mrf.mxu0
      %v207 = vadd.f32 %v96, %v206
      %v208 = vpop.f32.mrf.mxu0
      %v209 = vadd.f32 %v96, %v208
      %210 = vmatprep.mubr.f32.mxu0 0.0
      %211 = vmatmul.mubr.f32.gmra.mxu0 %v116
      %v212 = vpop.f32.mrf.mxu0
      %v213 = vadd.f32 %v101, %v212
      %v214 = vpop.f32.mrf.mxu0
      %v215 = vadd.f32 %v101, %v214
      %216 = vmatprep.mubr.f32.mxu0 0.0
      %217 = vmatmul.mubr.f32.gmra.mxu0 %v119
      %v218 = vpop.f32.mrf.mxu0
      %v219 = vadd.f32 %v106, %v218
      %v220 = vpop.f32.mrf.mxu0
      %v221 = vadd.f32 %v106, %v220
      %222 = vdwg.mxu0
      %223 = vmatprep.subr.mxu0 0.0
      %224 = vmatpush1.msra.mxu0 0.0
      %225 = vmatprep.subr.mxu0 0.0
      %226 = vmatpush1.msra.mxu0 0.0
      %227 = vmatprep.subr.mxu0 0.0
      %228 = vmatpush1.msra.mxu0 0.0
      %229 = vmatprep.subr.mxu0 0.0
      %230 = vmatpush1.msra.mxu0 0.0
      %231 = vmatprep.subr.mxu0 0.0
      %232 = vmatpush1.msra.mxu0 0.0
      %233 = vmatprep.subr.mxu0 0.0
      %234 = vmatpush1.msra.mxu0 0.0
      %235 = vmatprep.subr.mxu0 0.0
      %236 = vmatpush1.msra.mxu0 0.0
      %237 = vmatprep.subr.mxu0 0.0
      %238 = vmatpush1.msra.mxu0 0.0
      %239 = vmatprep.subr.mxu0 0.0
      %240 = vmatpush1.msra.mxu0 0.0
      %241 = vmatprep.subr.mxu0 0.0
      %242 = vmatpush1.msra.mxu0 0.0
      %243 = vmatprep.subr.mxu0 0.0
      %244 = vmatpush1.msra.mxu0 0.0
      %245 = vmatprep.subr.mxu0 0.0
      %246 = vmatpush1.msra.mxu0 0.0
      %247 = vmatprep.subr.mxu0 0.0
      %248 = vmatpush1.msra.mxu0 0.0
      %249 = vmatprep.subr.mxu0 0.0
      %250 = vmatpush1.msra.mxu0 0.0
      %251 = vmatprep.subr.mxu0 %v132
      %252 = vmatpush1.msra.mxu0 %v129
      %253 = vmatprep.subr.mxu0 %v83
      %254 = vmatpush1.msra.mxu0 %v82
      %255 = vmatprep.subr.mxu0 0.0
      %256 = vmatpush2.msra.mxu0 0.0
      %257 = vmatprep.subr.mxu0 0.0
      %258 = vmatpush2.msra.mxu0 0.0
      %259 = vmatprep.subr.mxu0 0.0
      %260 = vmatpush2.msra.mxu0 0.0
      %261 = vmatprep.subr.mxu0 0.0
      %262 = vmatpush2.msra.mxu0 0.0
      %263 = vmatprep.subr.mxu0 0.0
      %264 = vmatpush2.msra.mxu0 0.0
      %265 = vmatprep.subr.mxu0 0.0
      %266 = vmatpush2.msra.mxu0 0.0
      %267 = vmatprep.subr.mxu0 0.0
      %268 = vmatpush2.msra.mxu0 0.0
      %269 = vmatprep.subr.mxu0 0.0
      %270 = vmatpush2.msra.mxu0 0.0
      %271 = vmatprep.subr.mxu0 0.0
      %272 = vmatpush2.msra.mxu0 0.0
      %273 = vmatprep.subr.mxu0 0.0
      %274 = vmatpush2.msra.mxu0 0.0
      %275 = vmatprep.subr.mxu0 0.0
      %276 = vmatpush2.msra.mxu0 0.0
      %277 = vmatprep.subr.mxu0 0.0
      %278 = vmatpush2.msra.mxu0 0.0
      %279 = vmatprep.subr.mxu0 0.0
      %280 = vmatpush2.msra.mxu0 0.0
      %281 = vmatprep.subr.mxu0 0.0
      %282 = vmatpush2.msra.mxu0 0.0
      %283 = vmatprep.subr.mxu0 0.0
      %284 = vmatpush2.msra.mxu0 0.0
      %285 = vmatprep.subr.mxu0 0.0
      %286 = vmatpush2.msra.mxu0 0.0
      %287 = vmatprep.mubr.f32.mxu0 0.0
      %288 = vmatmul.mubr.f32.gmra.mxu0 %v110
      %v289 = vpop.f32.mrf.mxu0
      %v290 = vadd.f32 %v91, %v289
      %v291 = vpop.f32.mrf.mxu0
      %v292 = vadd.f32 %v91, %v291
      %293 = vmatprep.mubr.f32.mxu0 0.0
      %294 = vmatmul.mubr.f32.gmra.mxu0 %v113
      %v295 = vpop.f32.mrf.mxu0
      %v296 = vadd.f32 %v96, %v295
      %v297 = vpop.f32.mrf.mxu0
      %v298 = vadd.f32 %v96, %v297
      %299 = vmatprep.mubr.f32.mxu0 0.0
      %300 = vmatmul.mubr.f32.gmra.mxu0 %v116
      %v301 = vpop.f32.mrf.mxu0
      %v302 = vadd.f32 %v101, %v301
      %v303 = vpop.f32.mrf.mxu0
      %v304 = vadd.f32 %v101, %v303
      %305 = vmatprep.mubr.f32.mxu0 0.0
      %306 = vmatmul.mubr.f32.gmra.mxu0 %v119
      %v307 = vpop.f32.mrf.mxu0
      %v308 = vadd.f32 %v106, %v307
      %v309 = vpop.f32.mrf.mxu0
      %v310 = vadd.f32 %v106, %v309
      %311 = vdwg.mxu0
      %v312 = vmax.f32 %v201, 0.0
      %v313 = vmax.f32 %v203, 0.0
      %v314 = vmax.f32 %v290, 0.0
      %v315 = vmax.f32 %v292, 0.0
      %v316 = vmax.f32 %v207, 0.0
      %v317 = vmax.f32 %v209, 0.0
      %v318 = vmax.f32 %v296, 0.0
      %v319 = vmax.f32 %v298, 0.0
      %v320 = vmax.f32 %v213, 0.0
      %v321 = vmax.f32 %v215, 0.0
      %v322 = vmax.f32 %v302, 0.0
      %v323 = vmax.f32 %v304, 0.0
      %v324 = vmax.f32 %v219, 0.0
      %v325 = vmax.f32 %v221, 0.0
      %v326 = vmax.f32 %v308, 0.0
      %v327 = vmax.f32 %v310, 0.0
      %329 = vset.pattern.permute.xlu0 0
      %330 = vperm.xlu0 %329, %v41
      %v331 = vpop.permute.xlu0 %330
      %334 = vset.pattern.permute.xlu0 0
      %335 = vperm.xlu0 %334, %v42
      %v336 = vpop.permute.xlu0 %335
      %vm338 = vcmask 261120
      %v340 = vsel %vm338, %v38, 0
      %v343 = vsel %vm338, %v39, 0
      %345 = vmatprep.subr.mxu0 0.0
      %346 = vmatpush1.msra.mxu0 0.0
      %347 = vmatprep.subr.mxu0 0.0
      %348 = vmatpush1.msra.mxu0 0.0
      %349 = vmatprep.subr.mxu0 0.0
      %350 = vmatpush1.msra.mxu0 0.0
      %351 = vmatprep.subr.mxu0 0.0
      %352 = vmatpush1.msra.mxu0 0.0
      %353 = vmatprep.subr.mxu0 0.0
      %354 = vmatpush1.msra.mxu0 0.0
      %355 = vmatprep.subr.mxu0 0.0
      %356 = vmatpush1.msra.mxu0 0.0
      %357 = vmatprep.subr.mxu0 0.0
      %358 = vmatpush1.msra.mxu0 0.0
      %359 = vmatprep.subr.mxu0 0.0
      %360 = vmatpush1.msra.mxu0 0.0
      %361 = vmatprep.subr.mxu0 0.0
      %362 = vmatpush1.msra.mxu0 0.0
      %363 = vmatprep.subr.mxu0 0.0
      %364 = vmatpush1.msra.mxu0 0.0
      %365 = vmatprep.subr.mxu0 0.0
      %366 = vmatpush1.msra.mxu0 0.0
      %367 = vmatprep.subr.mxu0 0.0
      %368 = vmatpush1.msra.mxu0 0.0
      %369 = vmatprep.subr.mxu0 %v325
      %370 = vmatpush1.msra.mxu0 %v324
      %371 = vmatprep.subr.mxu0 %v321
      %372 = vmatpush1.msra.mxu0 %v320
      %373 = vmatprep.subr.mxu0 %v317
      %374 = vmatpush1.msra.mxu0 %v316
      %375 = vmatprep.subr.mxu0 %v313
      %376 = vmatpush1.msra.mxu0 %v312
      %377 = vmatprep.subr.mxu0 0.0
      %378 = vmatpush2.msra.mxu0 0.0
      %379 = vmatprep.subr.mxu0 0.0
      %380 = vmatpush2.msra.mxu0 0.0
      %381 = vmatprep.subr.mxu0 0.0
      %382 = vmatpush2.msra.mxu0 0.0
      %383 = vmatprep.subr.mxu0 0.0
      %384 = vmatpush2.msra.mxu0 0.0
      %385 = vmatprep.subr.mxu0 0.0
      %386 = vmatpush2.msra.mxu0 0.0
      %387 = vmatprep.subr.mxu0 0.0
      %388 = vmatpush2.msra.mxu0 0.0
      %389 = vmatprep.subr.mxu0 0.0
      %390 = vmatpush2.msra.mxu0 0.0
      %391 = vmatprep.subr.mxu0 0.0
      %392 = vmatpush2.msra.mxu0 0.0
      %393 = vmatprep.subr.mxu0 0.0
      %394 = vmatpush2.msra.mxu0 0.0
      %395 = vmatprep.subr.mxu0 0.0
      %396 = vmatpush2.msra.mxu0 0.0
      %397 = vmatprep.subr.mxu0 0.0
      %398 = vmatpush2.msra.mxu0 0.0
      %399 = vmatprep.subr.mxu0 0.0
      %400 = vmatpush2.msra.mxu0 0.0
      %401 = vmatprep.subr.mxu0 0.0
      %402 = vmatpush2.msra.mxu0 0.0
      %403 = vmatprep.subr.mxu0 0.0
      %404 = vmatpush2.msra.mxu0 0.0
      %405 = vmatprep.subr.mxu0 0.0
      %406 = vmatpush2.msra.mxu0 0.0
      %407 = vmatprep.subr.mxu0 0.0
      %408 = vmatpush2.msra.mxu0 0.0
      %409 = vmatprep.mubr.f32.mxu0 0.0
      %410 = vmatmul.mubr.f32.gmra.mxu0 %v340
      %v411 = vpop.f32.mrf.mxu0
      %v412 = vadd.f32 %v331, %v411
      %v413 = vpop.f32.mrf.mxu0
      %v414 = vadd.f32 %v331, %v413
      %415 = vmatprep.mubr.f32.mxu0 0.0
      %416 = vmatmul.mubr.f32.gmra.mxu0 %v343
      %v417 = vpop.f32.mrf.mxu0
      %v418 = vadd.f32 %v336, %v417
      %v419 = vpop.f32.mrf.mxu0
      %v420 = vadd.f32 %v336, %v419
      %421 = vdwg.mxu0
      %422 = vmatprep.subr.mxu0 0.0
      %423 = vmatpush1.msra.mxu0 0.0
      %424 = vmatprep.subr.mxu0 0.0
      %425 = vmatpush1.msra.mxu0 0.0
      %426 = vmatprep.subr.mxu0 0.0
      %427 = vmatpush1.msra.mxu0 0.0
      %428 = vmatprep.subr.mxu0 0.0
      %429 = vmatpush1.msra.mxu0 0.0
      %430 = vmatprep.subr.mxu0 0.0
      %431 = vmatpush1.msra.mxu0 0.0
      %432 = vmatprep.subr.mxu0 0.0
      %433 = vmatpush1.msra.mxu0 0.0
      %434 = vmatprep.subr.mxu0 0.0
      %435 = vmatpush1.msra.mxu0 0.0
      %436 = vmatprep.subr.mxu0 0.0
      %437 = vmatpush1.msra.mxu0 0.0
      %438 = vmatprep.subr.mxu0 0.0
      %439 = vmatpush1.msra.mxu0 0.0
      %440 = vmatprep.subr.mxu0 0.0
      %441 = vmatpush1.msra.mxu0 0.0
      %442 = vmatprep.subr.mxu0 0.0
      %443 = vmatpush1.msra.mxu0 0.0
      %444 = vmatprep.subr.mxu0 0.0
      %445 = vmatpush1.msra.mxu0 0.0
      %446 = vmatprep.subr.mxu0 %v327
      %447 = vmatpush1.msra.mxu0 %v326
      %448 = vmatprep.subr.mxu0 %v323
      %449 = vmatpush1.msra.mxu0 %v322
      %450 = vmatprep.subr.mxu0 %v319
      %451 = vmatpush1.msra.mxu0 %v318
      %452 = vmatprep.subr.mxu0 %v315
      %453 = vmatpush1.msra.mxu0 %v314
      %454 = vmatprep.subr.mxu0 0.0
      %455 = vmatpush2.msra.mxu0 0.0
      %456 = vmatprep.subr.mxu0 0.0
      %457 = vmatpush2.msra.mxu0 0.0
      %458 = vmatprep.subr.mxu0 0.0
      %459 = vmatpush2.msra.mxu0 0.0
      %460 = vmatprep.subr.mxu0 0.0
      %461 = vmatpush2.msra.mxu0 0.0
      %462 = vmatprep.subr.mxu0 0.0
      %463 = vmatpush2.msra.mxu0 0.0
      %464 = vmatprep.subr.mxu0 0.0
      %465 = vmatpush2.msra.mxu0 0.0
      %466 = vmatprep.subr.mxu0 0.0
      %467 = vmatpush2.msra.mxu0 0.0
      %468 = vmatprep.subr.mxu0 0.0
      %469 = vmatpush2.msra.mxu0 0.0
      %470 = vmatprep.subr.mxu0 0.0
      %471 = vmatpush2.msra.mxu0 0.0
      %472 = vmatprep.subr.mxu0 0.0
      %473 = vmatpush2.msra.mxu0 0.0
      %474 = vmatprep.subr.mxu0 0.0
      %475 = vmatpush2.msra.mxu0 0.0
      %476 = vmatprep.subr.mxu0 0.0
      %477 = vmatpush2.msra.mxu0 0.0
      %478 = vmatprep.subr.mxu0 0.0
      %479 = vmatpush2.msra.mxu0 0.0
      %480 = vmatprep.subr.mxu0 0.0
      %481 = vmatpush2.msra.mxu0 0.0
      %482 = vmatprep.subr.mxu0 0.0
      %483 = vmatpush2.msra.mxu0 0.0
      %484 = vmatprep.subr.mxu0 0.0
      %485 = vmatpush2.msra.mxu0 0.0
      %486 = vmatprep.mubr.f32.mxu0 0.0
      %487 = vmatmul.mubr.f32.gmra.mxu0 %v340
      %v488 = vpop.f32.mrf.mxu0
      %v489 = vadd.f32 %v331, %v488
      %v490 = vpop.f32.mrf.mxu0
      %v491 = vadd.f32 %v331, %v490
      %492 = vmatprep.mubr.f32.mxu0 0.0
      %493 = vmatmul.mubr.f32.gmra.mxu0 %v343
      %v494 = vpop.f32.mrf.mxu0
      %v495 = vadd.f32 %v336, %v494
      %v496 = vpop.f32.mrf.mxu0
      %v497 = vadd.f32 %v336, %v496
      %498 = vdwg.mxu0
      %v499 = vmax.f32 %v412, 0.0
      %v500 = vmax.f32 %v414, 0.0
      %v501 = vmax.f32 %v489, 0.0
      %v502 = vmax.f32 %v491, 0.0
      %v503 = vmax.f32 %v418, 0.0
      %v504 = vmax.f32 %v420, 0.0
      %v505 = vmax.f32 %v495, 0.0
      %v506 = vmax.f32 %v497, 0.0
      %508 = vset.pattern.permute.xlu0 0
      %509 = vperm.xlu0 %508, %v46
      %v510 = vpop.permute.xlu0 %509
      %vm512 = vcmask 130048
      %v514 = vsel %vm512, %v44, 0
      %516 = vmatprep.subr.mxu0 0.0
      %517 = vmatpush1.msra.mxu0 0.0
      %518 = vmatprep.subr.mxu0 0.0
      %519 = vmatpush1.msra.mxu0 0.0
      %520 = vmatprep.subr.mxu0 0.0
      %521 = vmatpush1.msra.mxu0 0.0
      %522 = vmatprep.subr.mxu0 0.0
      %523 = vmatpush1.msra.mxu0 0.0
      %524 = vmatprep.subr.mxu0 0.0
      %525 = vmatpush1.msra.mxu0 0.0
      %526 = vmatprep.subr.mxu0 0.0
      %527 = vmatpush1.msra.mxu0 0.0
      %528 = vmatprep.subr.mxu0 0.0
      %529 = vmatpush1.msra.mxu0 0.0
      %530 = vmatprep.subr.mxu0 0.0
      %531 = vmatpush1.msra.mxu0 0.0
      %532 = vmatprep.subr.mxu0 0.0
      %533 = vmatpush1.msra.mxu0 0.0
      %534 = vmatprep.subr.mxu0 0.0
      %535 = vmatpush1.msra.mxu0 0.0
      %536 = vmatprep.subr.mxu0 0.0
      %537 = vmatpush1.msra.mxu0 0.0
      %538 = vmatprep.subr.mxu0 0.0
      %539 = vmatpush1.msra.mxu0 0.0
      %540 = vmatprep.subr.mxu0 0.0
      %541 = vmatpush1.msra.mxu0 0.0
      %542 = vmatprep.subr.mxu0 0.0
      %543 = vmatpush1.msra.mxu0 0.0
      %544 = vmatprep.subr.mxu0 %v504
      %545 = vmatpush1.msra.mxu0 %v503
      %546 = vmatprep.subr.mxu0 %v500
      %547 = vmatpush1.msra.mxu0 %v499
      %548 = vmatprep.subr.mxu0 0.0
      %549 = vmatpush2.msra.mxu0 0.0
      %550 = vmatprep.subr.mxu0 0.0
      %551 = vmatpush2.msra.mxu0 0.0
      %552 = vmatprep.subr.mxu0 0.0
      %553 = vmatpush2.msra.mxu0 0.0
      %554 = vmatprep.subr.mxu0 0.0
      %555 = vmatpush2.msra.mxu0 0.0
      %556 = vmatprep.subr.mxu0 0.0
      %557 = vmatpush2.msra.mxu0 0.0
      %558 = vmatprep.subr.mxu0 0.0
      %559 = vmatpush2.msra.mxu0 0.0
      %560 = vmatprep.subr.mxu0 0.0
      %561 = vmatpush2.msra.mxu0 0.0
      %562 = vmatprep.subr.mxu0 0.0
      %563 = vmatpush2.msra.mxu0 0.0
      %564 = vmatprep.subr.mxu0 0.0
      %565 = vmatpush2.msra.mxu0 0.0
      %566 = vmatprep.subr.mxu0 0.0
      %567 = vmatpush2.msra.mxu0 0.0
      %568 = vmatprep.subr.mxu0 0.0
      %569 = vmatpush2.msra.mxu0 0.0
      %570 = vmatprep.subr.mxu0 0.0
      %571 = vmatpush2.msra.mxu0 0.0
      %572 = vmatprep.subr.mxu0 0.0
      %573 = vmatpush2.msra.mxu0 0.0
      %574 = vmatprep.subr.mxu0 0.0
      %575 = vmatpush2.msra.mxu0 0.0
      %576 = vmatprep.subr.mxu0 0.0
      %577 = vmatpush2.msra.mxu0 0.0
      %578 = vmatprep.subr.mxu0 0.0
      %579 = vmatpush2.msra.mxu0 0.0
      %580 = vmatprep.mubr.f32.mxu0 0.0
      %581 = vmatmul.mubr.f32.gmra.mxu0 %v514
      %v582 = vpop.f32.mrf.mxu0
      %v583 = vadd.f32 %v510, %v582
      %v584 = vpop.f32.mrf.mxu0
      %v585 = vadd.f32 %v510, %v584
      %586 = vdwg.mxu0
      %587 = vmatprep.subr.mxu0 0.0
      %588 = vmatpush1.msra.mxu0 0.0
      %589 = vmatprep.subr.mxu0 0.0
      %590 = vmatpush1.msra.mxu0 0.0
      %591 = vmatprep.subr.mxu0 0.0
      %592 = vmatpush1.msra.mxu0 0.0
      %593 = vmatprep.subr.mxu0 0.0
      %594 = vmatpush1.msra.mxu0 0.0
      %595 = vmatprep.subr.mxu0 0.0
      %596 = vmatpush1.msra.mxu0 0.0
      %597 = vmatprep.subr.mxu0 0.0
      %598 = vmatpush1.msra.mxu0 0.0
      %599 = vmatprep.subr.mxu0 0.0
      %600 = vmatpush1.msra.mxu0 0.0
      %601 = vmatprep.subr.mxu0 0.0
      %602 = vmatpush1.msra.mxu0 0.0
      %603 = vmatprep.subr.mxu0 0.0
      %604 = vmatpush1.msra.mxu0 0.0
      %605 = vmatprep.subr.mxu0 0.0
      %606 = vmatpush1.msra.mxu0 0.0
      %607 = vmatprep.subr.mxu0 0.0
      %608 = vmatpush1.msra.mxu0 0.0
      %609 = vmatprep.subr.mxu0 0.0
      %610 = vmatpush1.msra.mxu0 0.0
      %611 = vmatprep.subr.mxu0 0.0
      %612 = vmatpush1.msra.mxu0 0.0
      %613 = vmatprep.subr.mxu0 0.0
      %614 = vmatpush1.msra.mxu0 0.0
      %615 = vmatprep.subr.mxu0 %v506
      %616 = vmatpush1.msra.mxu0 %v505
      %617 = vmatprep.subr.mxu0 %v502
      %618 = vmatpush1.msra.mxu0 %v501
      %619 = vmatprep.subr.mxu0 0.0
      %620 = vmatpush2.msra.mxu0 0.0
      %621 = vmatprep.subr.mxu0 0.0
      %622 = vmatpush2.msra.mxu0 0.0
      %623 = vmatprep.subr.mxu0 0.0
      %624 = vmatpush2.msra.mxu0 0.0
      %625 = vmatprep.subr.mxu0 0.0
      %626 = vmatpush2.msra.mxu0 0.0
      %627 = vmatprep.subr.mxu0 0.0
      %628 = vmatpush2.msra.mxu0 0.0
      %629 = vmatprep.subr.mxu0 0.0
      %630 = vmatpush2.msra.mxu0 0.0
      %631 = vmatprep.subr.mxu0 0.0
      %632 = vmatpush2.msra.mxu0 0.0
      %633 = vmatprep.subr.mxu0 0.0
      %634 = vmatpush2.msra.mxu0 0.0
      %635 = vmatprep.subr.mxu0 0.0
      %636 = vmatpush2.msra.mxu0 0.0
      %637 = vmatprep.subr.mxu0 0.0
      %638 = vmatpush2.msra.mxu0 0.0
      %639 = vmatprep.subr.mxu0 0.0
      %640 = vmatpush2.msra.mxu0 0.0
      %641 = vmatprep.subr.mxu0 0.0
      %642 = vmatpush2.msra.mxu0 0.0
      %643 = vmatprep.subr.mxu0 0.0
      %644 = vmatpush2.msra.mxu0 0.0
      %645 = vmatprep.subr.mxu0 0.0
      %646 = vmatpush2.msra.mxu0 0.0
      %647 = vmatprep.subr.mxu0 0.0
      %648 = vmatpush2.msra.mxu0 0.0
      %649 = vmatprep.subr.mxu0 0.0
      %650 = vmatpush2.msra.mxu0 0.0
      %651 = vmatprep.mubr.f32.mxu0 0.0
      %652 = vmatmul.mubr.f32.gmra.mxu0 %v514
      %v653 = vpop.f32.mrf.mxu0
      %v654 = vadd.f32 %v510, %v653
      %v655 = vpop.f32.mrf.mxu0
      %v656 = vadd.f32 %v510, %v655
      %657 = vdwg.mxu0
      %v658 = vmax.f32 %v583, 0.0
      %v659 = vmax.f32 %v585, 0.0
      %v660 = vmax.f32 %v654, 0.0
      %v661 = vmax.f32 %v656, 0.0
      %663 = vset.pattern.permute.xlu0 0
      %664 = vperm.xlu0 %663, %v51
      %v665 = vpop.permute.xlu0 %664
      %668 = vset.pattern.permute.xlu0 0
      %669 = vperm.xlu0 %668, %v52
      %v670 = vpop.permute.xlu0 %669
      %vm672 = vcmask 64512
      %v674 = vsel %vm672, %v48, 0
      %v677 = vsel %vm672, %v49, 0
      %679 = vmatprep.subr.mxu0 0.0
      %680 = vmatpush1.msra.mxu0 0.0
      %681 = vmatprep.subr.mxu0 0.0
      %682 = vmatpush1.msra.mxu0 0.0
      %683 = vmatprep.subr.mxu0 0.0
      %684 = vmatpush1.msra.mxu0 0.0
      %685 = vmatprep.subr.mxu0 0.0
      %686 = vmatpush1.msra.mxu0 0.0
      %687 = vmatprep.subr.mxu0 0.0
      %688 = vmatpush1.msra.mxu0 0.0
      %689 = vmatprep.subr.mxu0 0.0
      %690 = vmatpush1.msra.mxu0 0.0
      %691 = vmatprep.subr.mxu0 0.0
      %692 = vmatpush1.msra.mxu0 0.0
      %693 = vmatprep.subr.mxu0 0.0
      %694 = vmatpush1.msra.mxu0 0.0
      %695 = vmatprep.subr.mxu0 0.0
      %696 = vmatpush1.msra.mxu0 0.0
      %697 = vmatprep.subr.mxu0 0.0
      %698 = vmatpush1.msra.mxu0 0.0
      %699 = vmatprep.subr.mxu0 0.0
      %700 = vmatpush1.msra.mxu0 0.0
      %701 = vmatprep.subr.mxu0 0.0
      %702 = vmatpush1.msra.mxu0 0.0
      %703 = vmatprep.subr.mxu0 0.0
      %704 = vmatpush1.msra.mxu0 0.0
      %705 = vmatprep.subr.mxu0 0.0
      %706 = vmatpush1.msra.mxu0 0.0
      %707 = vmatprep.subr.mxu0 0.0
      %708 = vmatpush1.msra.mxu0 0.0
      %709 = vmatprep.subr.mxu0 %v659
      %710 = vmatpush1.msra.mxu0 %v658
      %711 = vmatprep.subr.mxu0 0.0
      %712 = vmatpush2.msra.mxu0 0.0
      %713 = vmatprep.subr.mxu0 0.0
      %714 = vmatpush2.msra.mxu0 0.0
      %715 = vmatprep.subr.mxu0 0.0
      %716 = vmatpush2.msra.mxu0 0.0
      %717 = vmatprep.subr.mxu0 0.0
      %718 = vmatpush2.msra.mxu0 0.0
      %719 = vmatprep.subr.mxu0 0.0
      %720 = vmatpush2.msra.mxu0 0.0
      %721 = vmatprep.subr.mxu0 0.0
      %722 = vmatpush2.msra.mxu0 0.0
      %723 = vmatprep.subr.mxu0 0.0
      %724 = vmatpush2.msra.mxu0 0.0
      %725 = vmatprep.subr.mxu0 0.0
      %726 = vmatpush2.msra.mxu0 0.0
      %727 = vmatprep.subr.mxu0 0.0
      %728 = vmatpush2.msra.mxu0 0.0
      %729 = vmatprep.subr.mxu0 0.0
      %730 = vmatpush2.msra.mxu0 0.0
      %731 = vmatprep.subr.mxu0 0.0
      %732 = vmatpush2.msra.mxu0 0.0
      %733 = vmatprep.subr.mxu0 0.0
      %734 = vmatpush2.msra.mxu0 0.0
      %735 = vmatprep.subr.mxu0 0.0
      %736 = vmatpush2.msra.mxu0 0.0
      %737 = vmatprep.subr.mxu0 0.0
      %738 = vmatpush2.msra.mxu0 0.0
      %739 = vmatprep.subr.mxu0 0.0
      %740 = vmatpush2.msra.mxu0 0.0
      %741 = vmatprep.subr.mxu0 0.0
      %742 = vmatpush2.msra.mxu0 0.0
      %743 = vmatprep.mubr.f32.mxu0 0.0
      %744 = vmatmul.mubr.f32.gmra.mxu0 %v674
      %v745 = vpop.f32.mrf.mxu0
      %v746 = vadd.f32 %v665, %v745
      %v747 = vpop.f32.mrf.mxu0
      %v748 = vadd.f32 %v665, %v747
      %749 = vmatprep.mubr.f32.mxu0 0.0
      %750 = vmatmul.mubr.f32.gmra.mxu0 %v677
      %v751 = vpop.f32.mrf.mxu0
      %v752 = vadd.f32 %v670, %v751
      %v753 = vpop.f32.mrf.mxu0
      %v754 = vadd.f32 %v670, %v753
      %755 = vdwg.mxu0
      %756 = vmatprep.subr.mxu0 0.0
      %757 = vmatpush1.msra.mxu0 0.0
      %758 = vmatprep.subr.mxu0 0.0
      %759 = vmatpush1.msra.mxu0 0.0
      %760 = vmatprep.subr.mxu0 0.0
      %761 = vmatpush1.msra.mxu0 0.0
      %762 = vmatprep.subr.mxu0 0.0
      %763 = vmatpush1.msra.mxu0 0.0
      %764 = vmatprep.subr.mxu0 0.0
      %765 = vmatpush1.msra.mxu0 0.0
      %766 = vmatprep.subr.mxu0 0.0
      %767 = vmatpush1.msra.mxu0 0.0
      %768 = vmatprep.subr.mxu0 0.0
      %769 = vmatpush1.msra.mxu0 0.0
      %770 = vmatprep.subr.mxu0 0.0
      %771 = vmatpush1.msra.mxu0 0.0
      %772 = vmatprep.subr.mxu0 0.0
      %773 = vmatpush1.msra.mxu0 0.0
      %774 = vmatprep.subr.mxu0 0.0
      %775 = vmatpush1.msra.mxu0 0.0
      %776 = vmatprep.subr.mxu0 0.0
      %777 = vmatpush1.msra.mxu0 0.0
      %778 = vmatprep.subr.mxu0 0.0
      %779 = vmatpush1.msra.mxu0 0.0
      %780 = vmatprep.subr.mxu0 0.0
      %781 = vmatpush1.msra.mxu0 0.0
      %782 = vmatprep.subr.mxu0 0.0
      %783 = vmatpush1.msra.mxu0 0.0
      %784 = vmatprep.subr.mxu0 0.0
      %785 = vmatpush1.msra.mxu0 0.0
      %786 = vmatprep.subr.mxu0 %v661
      %787 = vmatpush1.msra.mxu0 %v660
      %788 = vmatprep.subr.mxu0 0.0
      %789 = vmatpush2.msra.mxu0 0.0
      %790 = vmatprep.subr.mxu0 0.0
      %791 = vmatpush2.msra.mxu0 0.0
      %792 = vmatprep.subr.mxu0 0.0
      %793 = vmatpush2.msra.mxu0 0.0
      %794 = vmatprep.subr.mxu0 0.0
      %795 = vmatpush2.msra.mxu0 0.0
      %796 = vmatprep.subr.mxu0 0.0
      %797 = vmatpush2.msra.mxu0 0.0
      %798 = vmatprep.subr.mxu0 0.0
      %799 = vmatpush2.msra.mxu0 0.0
      %800 = vmatprep.subr.mxu0 0.0
      %801 = vmatpush2.msra.mxu0 0.0
      %802 = vmatprep.subr.mxu0 0.0
      %803 = vmatpush2.msra.mxu0 0.0
      %804 = vmatprep.subr.mxu0 0.0
      %805 = vmatpush2.msra.mxu0 0.0
      %806 = vmatprep.subr.mxu0 0.0
      %807 = vmatpush2.msra.mxu0 0.0
      %808 = vmatprep.subr.mxu0 0.0
      %809 = vmatpush2.msra.mxu0 0.0
      %810 = vmatprep.subr.mxu0 0.0
      %811 = vmatpush2.msra.mxu0 0.0
      %812 = vmatprep.subr.mxu0 0.0
      %813 = vmatpush2.msra.mxu0 0.0
      %814 = vmatprep.subr.mxu0 0.0
      %815 = vmatpush2.msra.mxu0 0.0
      %816 = vmatprep.subr.mxu0 0.0
      %817 = vmatpush2.msra.mxu0 0.0
      %818 = vmatprep.subr.mxu0 0.0
      %819 = vmatpush2.msra.mxu0 0.0
      %820 = vmatprep.mubr.f32.mxu0 0.0
      %821 = vmatmul.mubr.f32.gmra.mxu0 %v674
      %v822 = vpop.f32.mrf.mxu0
      %v823 = vadd.f32 %v665, %v822
      %v824 = vpop.f32.mrf.mxu0
      %v825 = vadd.f32 %v665, %v824
      %826 = vmatprep.mubr.f32.mxu0 0.0
      %827 = vmatmul.mubr.f32.gmra.mxu0 %v677
      %v828 = vpop.f32.mrf.mxu0
      %v829 = vadd.f32 %v670, %v828
      %v830 = vpop.f32.mrf.mxu0
      %v831 = vadd.f32 %v670, %v830
      %832 = vdwg.mxu0
      %v833 = vmax.f32 %v746, 0.0
      %v834 = vmax.f32 %v748, 0.0
      %v835 = vmax.f32 %v823, 0.0
      %v836 = vmax.f32 %v825, 0.0
      %v837 = vmax.f32 %v752, 0.0
      %v838 = vmax.f32 %v754, 0.0
      %v839 = vmax.f32 %v829, 0.0
      %v840 = vmax.f32 %v831, 0.0
      %842 = vset.pattern.permute.xlu0 0
      %843 = vperm.xlu0 %842, %v59
      %v844 = vpop.permute.xlu0 %843
      %847 = vset.pattern.permute.xlu0 0
      %848 = vperm.xlu0 %847, %v60
      %v849 = vpop.permute.xlu0 %848
      %852 = vset.pattern.permute.xlu0 0
      %853 = vperm.xlu0 %852, %v61
      %v854 = vpop.permute.xlu0 %853
      %857 = vset.pattern.permute.xlu0 0
      %858 = vperm.xlu0 %857, %v62
      %v859 = vpop.permute.xlu0 %858
      %v862 = vsel %vm512, %v54, 0
      %v865 = vsel %vm512, %v55, 0
      %v868 = vsel %vm512, %v56, 0
      %v871 = vsel %vm512, %v57, 0
      %873 = vmatprep.subr.mxu0 0.0
      %874 = vmatpush1.msra.mxu0 0.0
      %875 = vmatprep.subr.mxu0 0.0
      %876 = vmatpush1.msra.mxu0 0.0
      %877 = vmatprep.subr.mxu0 0.0
      %878 = vmatpush1.msra.mxu0 0.0
      %879 = vmatprep.subr.mxu0 0.0
      %880 = vmatpush1.msra.mxu0 0.0
      %881 = vmatprep.subr.mxu0 0.0
      %882 = vmatpush1.msra.mxu0 0.0
      %883 = vmatprep.subr.mxu0 0.0
      %884 = vmatpush1.msra.mxu0 0.0
      %885 = vmatprep.subr.mxu0 0.0
      %886 = vmatpush1.msra.mxu0 0.0
      %887 = vmatprep.subr.mxu0 0.0
      %888 = vmatpush1.msra.mxu0 0.0
      %889 = vmatprep.subr.mxu0 0.0
      %890 = vmatpush1.msra.mxu0 0.0
      %891 = vmatprep.subr.mxu0 0.0
      %892 = vmatpush1.msra.mxu0 0.0
      %893 = vmatprep.subr.mxu0 0.0
      %894 = vmatpush1.msra.mxu0 0.0
      %895 = vmatprep.subr.mxu0 0.0
      %896 = vmatpush1.msra.mxu0 0.0
      %897 = vmatprep.subr.mxu0 0.0
      %898 = vmatpush1.msra.mxu0 0.0
      %899 = vmatprep.subr.mxu0 0.0
      %900 = vmatpush1.msra.mxu0 0.0
      %901 = vmatprep.subr.mxu0 %v838
      %902 = vmatpush1.msra.mxu0 %v837
      %903 = vmatprep.subr.mxu0 %v834
      %904 = vmatpush1.msra.mxu0 %v833
      %905 = vmatprep.subr.mxu0 0.0
      %906 = vmatpush2.msra.mxu0 0.0
      %907 = vmatprep.subr.mxu0 0.0
      %908 = vmatpush2.msra.mxu0 0.0
      %909 = vmatprep.subr.mxu0 0.0
      %910 = vmatpush2.msra.mxu0 0.0
      %911 = vmatprep.subr.mxu0 0.0
      %912 = vmatpush2.msra.mxu0 0.0
      %913 = vmatprep.subr.mxu0 0.0
      %914 = vmatpush2.msra.mxu0 0.0
      %915 = vmatprep.subr.mxu0 0.0
      %916 = vmatpush2.msra.mxu0 0.0
      %917 = vmatprep.subr.mxu0 0.0
      %918 = vmatpush2.msra.mxu0 0.0
      %919 = vmatprep.subr.mxu0 0.0
      %920 = vmatpush2.msra.mxu0 0.0
      %921 = vmatprep.subr.mxu0 0.0
      %922 = vmatpush2.msra.mxu0 0.0
      %923 = vmatprep.subr.mxu0 0.0
      %924 = vmatpush2.msra.mxu0 0.0
      %925 = vmatprep.subr.mxu0 0.0
      %926 = vmatpush2.msra.mxu0 0.0
      %927 = vmatprep.subr.mxu0 0.0
      %928 = vmatpush2.msra.mxu0 0.0
      %929 = vmatprep.subr.mxu0 0.0
      %930 = vmatpush2.msra.mxu0 0.0
      %931 = vmatprep.subr.mxu0 0.0
      %932 = vmatpush2.msra.mxu0 0.0
      %933 = vmatprep.subr.mxu0 0.0
      %934 = vmatpush2.msra.mxu0 0.0
      %935 = vmatprep.subr.mxu0 0.0
      %936 = vmatpush2.msra.mxu0 0.0
      %937 = vmatprep.mubr.f32.mxu0 0.0
      %938 = vmatmul.mubr.f32.gmra.mxu0 %v862
      %v939 = vpop.f32.mrf.mxu0
      %v940 = vadd.f32 %v844, %v939
      %v941 = vpop.f32.mrf.mxu0
      %v942 = vadd.f32 %v844, %v941
      %943 = vmatprep.mubr.f32.mxu0 0.0
      %944 = vmatmul.mubr.f32.gmra.mxu0 %v865
      %v945 = vpop.f32.mrf.mxu0
      %v946 = vadd.f32 %v849, %v945
      %v947 = vpop.f32.mrf.mxu0
      %v948 = vadd.f32 %v849, %v947
      %949 = vmatprep.mubr.f32.mxu0 0.0
      %950 = vmatmul.mubr.f32.gmra.mxu0 %v868
      %v951 = vpop.f32.mrf.mxu0
      %v952 = vadd.f32 %v854, %v951
      %v953 = vpop.f32.mrf.mxu0
      %v954 = vadd.f32 %v854, %v953
      %955 = vmatprep.mubr.f32.mxu0 0.0
      %956 = vmatmul.mubr.f32.gmra.mxu0 %v871
      %v957 = vpop.f32.mrf.mxu0
      %v958 = vadd.f32 %v859, %v957
      %v959 = vpop.f32.mrf.mxu0
      %v960 = vadd.f32 %v859, %v959
      %961 = vdwg.mxu0
      %962 = vmatprep.subr.mxu0 0.0
      %963 = vmatpush1.msra.mxu0 0.0
      %964 = vmatprep.subr.mxu0 0.0
      %965 = vmatpush1.msra.mxu0 0.0
      %966 = vmatprep.subr.mxu0 0.0
      %967 = vmatpush1.msra.mxu0 0.0
      %968 = vmatprep.subr.mxu0 0.0
      %969 = vmatpush1.msra.mxu0 0.0
      %970 = vmatprep.subr.mxu0 0.0
      %971 = vmatpush1.msra.mxu0 0.0
      %972 = vmatprep.subr.mxu0 0.0
      %973 = vmatpush1.msra.mxu0 0.0
      %974 = vmatprep.subr.mxu0 0.0
      %975 = vmatpush1.msra.mxu0 0.0
      %976 = vmatprep.subr.mxu0 0.0
      %977 = vmatpush1.msra.mxu0 0.0
      %978 = vmatprep.subr.mxu0 0.0
      %979 = vmatpush1.msra.mxu0 0.0
      %980 = vmatprep.subr.mxu0 0.0
      %981 = vmatpush1.msra.mxu0 0.0
      %982 = vmatprep.subr.mxu0 0.0
      %983 = vmatpush1.msra.mxu0 0.0
      %984 = vmatprep.subr.mxu0 0.0
      %985 = vmatpush1.msra.mxu0 0.0
      %986 = vmatprep.subr.mxu0 0.0
      %987 = vmatpush1.msra.mxu0 0.0
      %988 = vmatprep.subr.mxu0 0.0
      %989 = vmatpush1.msra.mxu0 0.0
      %990 = vmatprep.subr.mxu0 %v840
      %991 = vmatpush1.msra.mxu0 %v839
      %992 = vmatprep.subr.mxu0 %v836
      %993 = vmatpush1.msra.mxu0 %v835
      %994 = vmatprep.subr.mxu0 0.0
      %995 = vmatpush2.msra.mxu0 0.0
      %996 = vmatprep.subr.mxu0 0.0
      %997 = vmatpush2.msra.mxu0 0.0
      %998 = vmatprep.subr.mxu0 0.0
      %999 = vmatpush2.msra.mxu0 0.0
      %1000 = vmatprep.subr.mxu0 0.0
      %1001 = vmatpush2.msra.mxu0 0.0
      %1002 = vmatprep.subr.mxu0 0.0
      %1003 = vmatpush2.msra.mxu0 0.0
      %1004 = vmatprep.subr.mxu0 0.0
      %1005 = vmatpush2.msra.mxu0 0.0
      %1006 = vmatprep.subr.mxu0 0.0
      %1007 = vmatpush2.msra.mxu0 0.0
      %1008 = vmatprep.subr.mxu0 0.0
      %1009 = vmatpush2.msra.mxu0 0.0
      %1010 = vmatprep.subr.mxu0 0.0
      %1011 = vmatpush2.msra.mxu0 0.0
      %1012 = vmatprep.subr.mxu0 0.0
      %1013 = vmatpush2.msra.mxu0 0.0
      %1014 = vmatprep.subr.mxu0 0.0
      %1015 = vmatpush2.msra.mxu0 0.0
      %1016 = vmatprep.subr.mxu0 0.0
      %1017 = vmatpush2.msra.mxu0 0.0
      %1018 = vmatprep.subr.mxu0 0.0
      %1019 = vmatpush2.msra.mxu0 0.0
      %1020 = vmatprep.subr.mxu0 0.0
      %1021 = vmatpush2.msra.mxu0 0.0
      %1022 = vmatprep.subr.mxu0 0.0
      %1023 = vmatpush2.msra.mxu0 0.0
      %1024 = vmatprep.subr.mxu0 0.0
      %1025 = vmatpush2.msra.mxu0 0.0
      %1026 = vmatprep.mubr.f32.mxu0 0.0
      %1027 = vmatmul.mubr.f32.gmra.mxu0 %v862
      %v1028 = vpop.f32.mrf.mxu0
      %v1029 = vadd.f32 %v844, %v1028
      %v1030 = vpop.f32.mrf.mxu0
      %v1031 = vadd.f32 %v844, %v1030
      %1032 = vmatprep.mubr.f32.mxu0 0.0
      %1033 = vmatmul.mubr.f32.gmra.mxu0 %v865
      %v1034 = vpop.f32.mrf.mxu0
      %v1035 = vadd.f32 %v849, %v1034
      %v1036 = vpop.f32.mrf.mxu0
      %v1037 = vadd.f32 %v849, %v1036
      %1038 = vmatprep.mubr.f32.mxu0 0.0
      %1039 = vmatmul.mubr.f32.gmra.mxu0 %v868
      %v1040 = vpop.f32.mrf.mxu0
      %v1041 = vadd.f32 %v854, %v1040
      %v1042 = vpop.f32.mrf.mxu0
      %v1043 = vadd.f32 %v854, %v1042
      %1044 = vmatprep.mubr.f32.mxu0 0.0
      %1045 = vmatmul.mubr.f32.gmra.mxu0 %v871
      %v1046 = vpop.f32.mrf.mxu0
      %v1047 = vadd.f32 %v859, %v1046
      %v1048 = vpop.f32.mrf.mxu0
      %v1049 = vadd.f32 %v859, %v1048
      %1050 = vdwg.mxu0
      %v1051 = vmax.f32 %v940, 0.0
      %v1052 = vmax.f32 %v942, 0.0
      %v1053 = vmax.f32 %v1029, 0.0
      %v1054 = vmax.f32 %v1031, 0.0
      %v1055 = vmax.f32 %v946, 0.0
      %v1056 = vmax.f32 %v948, 0.0
      %v1057 = vmax.f32 %v1035, 0.0
      %v1058 = vmax.f32 %v1037, 0.0
      %v1059 = vmax.f32 %v952, 0.0
      %v1060 = vmax.f32 %v954, 0.0
      %v1061 = vmax.f32 %v1041, 0.0
      %v1062 = vmax.f32 %v1043, 0.0
      %v1063 = vmax.f32 %v958, 0.0
      %v1064 = vmax.f32 %v960, 0.0
      %v1065 = vmax.f32 %v1047, 0.0
      %v1066 = vmax.f32 %v1049, 0.0
      %1068 = vset.pattern.permute.xlu0 0
      %1069 = vperm.xlu0 %1068, %v67
      %v1070 = vpop.permute.xlu0 %1069
      %1073 = vset.pattern.permute.xlu0 0
      %1074 = vperm.xlu0 %1073, %v68
      %v1075 = vpop.permute.xlu0 %1074
      %v1078 = vsel %vm338, %v64, 0
      %v1081 = vsel %vm338, %v65, 0
      %1083 = vmatprep.subr.mxu0 0.0
      %1084 = vmatpush1.msra.mxu0 0.0
      %1085 = vmatprep.subr.mxu0 0.0
      %1086 = vmatpush1.msra.mxu0 0.0
      %1087 = vmatprep.subr.mxu0 0.0
      %1088 = vmatpush1.msra.mxu0 0.0
      %1089 = vmatprep.subr.mxu0 0.0
      %1090 = vmatpush1.msra.mxu0 0.0
      %1091 = vmatprep.subr.mxu0 0.0
      %1092 = vmatpush1.msra.mxu0 0.0
      %1093 = vmatprep.subr.mxu0 0.0
      %1094 = vmatpush1.msra.mxu0 0.0
      %1095 = vmatprep.subr.mxu0 0.0
      %1096 = vmatpush1.msra.mxu0 0.0
      %1097 = vmatprep.subr.mxu0 0.0
      %1098 = vmatpush1.msra.mxu0 0.0
      %1099 = vmatprep.subr.mxu0 0.0
      %1100 = vmatpush1.msra.mxu0 0.0
      %1101 = vmatprep.subr.mxu0 0.0
      %1102 = vmatpush1.msra.mxu0 0.0
      %1103 = vmatprep.subr.mxu0 0.0
      %1104 = vmatpush1.msra.mxu0 0.0
      %1105 = vmatprep.subr.mxu0 0.0
      %1106 = vmatpush1.msra.mxu0 0.0
      %1107 = vmatprep.subr.mxu0 %v1064
      %1108 = vmatpush1.msra.mxu0 %v1063
      %1109 = vmatprep.subr.mxu0 %v1060
      %1110 = vmatpush1.msra.mxu0 %v1059
      %1111 = vmatprep.subr.mxu0 %v1056
      %1112 = vmatpush1.msra.mxu0 %v1055
      %1113 = vmatprep.subr.mxu0 %v1052
      %1114 = vmatpush1.msra.mxu0 %v1051
      %1115 = vmatprep.subr.mxu0 0.0
      %1116 = vmatpush2.msra.mxu0 0.0
      %1117 = vmatprep.subr.mxu0 0.0
      %1118 = vmatpush2.msra.mxu0 0.0
      %1119 = vmatprep.subr.mxu0 0.0
      %1120 = vmatpush2.msra.mxu0 0.0
      %1121 = vmatprep.subr.mxu0 0.0
      %1122 = vmatpush2.msra.mxu0 0.0
      %1123 = vmatprep.subr.mxu0 0.0
      %1124 = vmatpush2.msra.mxu0 0.0
      %1125 = vmatprep.subr.mxu0 0.0
      %1126 = vmatpush2.msra.mxu0 0.0
      %1127 = vmatprep.subr.mxu0 0.0
      %1128 = vmatpush2.msra.mxu0 0.0
      %1129 = vmatprep.subr.mxu0 0.0
      %1130 = vmatpush2.msra.mxu0 0.0
      %1131 = vmatprep.subr.mxu0 0.0
      %1132 = vmatpush2.msra.mxu0 0.0
      %1133 = vmatprep.subr.mxu0 0.0
      %1134 = vmatpush2.msra.mxu0 0.0
      %1135 = vmatprep.subr.mxu0 0.0
      %1136 = vmatpush2.msra.mxu0 0.0
      %1137 = vmatprep.subr.mxu0 0.0
      %1138 = vmatpush2.msra.mxu0 0.0
      %1139 = vmatprep.subr.mxu0 0.0
      %1140 = vmatpush2.msra.mxu0 0.0
      %1141 = vmatprep.subr.mxu0 0.0
      %1142 = vmatpush2.msra.mxu0 0.0
      %1143 = vmatprep.subr.mxu0 0.0
      %1144 = vmatpush2.msra.mxu0 0.0
      %1145 = vmatprep.subr.mxu0 0.0
      %1146 = vmatpush2.msra.mxu0 0.0
      %1147 = vmatprep.mubr.f32.mxu0 0.0
      %1148 = vmatmul.mubr.f32.gmra.mxu0 %v1078
      %v1149 = vpop.f32.mrf.mxu0
      %v1150 = vadd.f32 %v1070, %v1149
      %v1151 = vpop.f32.mrf.mxu0
      %v1152 = vadd.f32 %v1070, %v1151
      %1153 = vmatprep.mubr.f32.mxu0 0.0
      %1154 = vmatmul.mubr.f32.gmra.mxu0 %v1081
      %v1155 = vpop.f32.mrf.mxu0
      %v1156 = vadd.f32 %v1075, %v1155
      %v1157 = vpop.f32.mrf.mxu0
      %v1158 = vadd.f32 %v1075, %v1157
      %1159 = vdwg.mxu0
      %1160 = vmatprep.subr.mxu0 0.0
      %1161 = vmatpush1.msra.mxu0 0.0
      %1162 = vmatprep.subr.mxu0 0.0
      %1163 = vmatpush1.msra.mxu0 0.0
      %1164 = vmatprep.subr.mxu0 0.0
      %1165 = vmatpush1.msra.mxu0 0.0
      %1166 = vmatprep.subr.mxu0 0.0
      %1167 = vmatpush1.msra.mxu0 0.0
      %1168 = vmatprep.subr.mxu0 0.0
      %1169 = vmatpush1.msra.mxu0 0.0
      %1170 = vmatprep.subr.mxu0 0.0
      %1171 = vmatpush1.msra.mxu0 0.0
      %1172 = vmatprep.subr.mxu0 0.0
      %1173 = vmatpush1.msra.mxu0 0.0
      %1174 = vmatprep.subr.mxu0 0.0
      %1175 = vmatpush1.msra.mxu0 0.0
      %1176 = vmatprep.subr.mxu0 0.0
      %1177 = vmatpush1.msra.mxu0 0.0
      %1178 = vmatprep.subr.mxu0 0.0
      %1179 = vmatpush1.msra.mxu0 0.0
      %1180 = vmatprep.subr.mxu0 0.0
      %1181 = vmatpush1.msra.mxu0 0.0
      %1182 = vmatprep.subr.mxu0 0.0
      %1183 = vmatpush1.msra.mxu0 0.0
      %1184 = vmatprep.subr.mxu0 %v1066
      %1185 = vmatpush1.msra.mxu0 %v1065
      %1186 = vmatprep.subr.mxu0 %v1062
      %1187 = vmatpush1.msra.mxu0 %v1061
      %1188 = vmatprep.subr.mxu0 %v1058
      %1189 = vmatpush1.msra.mxu0 %v1057
      %1190 = vmatprep.subr.mxu0 %v1054
      %1191 = vmatpush1.msra.mxu0 %v1053
      %1192 = vmatprep.subr.mxu0 0.0
      %1193 = vmatpush2.msra.mxu0 0.0
      %1194 = vmatprep.subr.mxu0 0.0
      %1195 = vmatpush2.msra.mxu0 0.0
      %1196 = vmatprep.subr.mxu0 0.0
      %1197 = vmatpush2.msra.mxu0 0.0
      %1198 = vmatprep.subr.mxu0 0.0
      %1199 = vmatpush2.msra.mxu0 0.0
      %1200 = vmatprep.subr.mxu0 0.0
      %1201 = vmatpush2.msra.mxu0 0.0
      %1202 = vmatprep.subr.mxu0 0.0
      %1203 = vmatpush2.msra.mxu0 0.0
      %1204 = vmatprep.subr.mxu0 0.0
      %1205 = vmatpush2.msra.mxu0 0.0
      %1206 = vmatprep.subr.mxu0 0.0
      %1207 = vmatpush2.msra.mxu0 0.0
      %1208 = vmatprep.subr.mxu0 0.0
      %1209 = vmatpush2.msra.mxu0 0.0
      %1210 = vmatprep.subr.mxu0 0.0
      %1211 = vmatpush2.msra.mxu0 0.0
      %1212 = vmatprep.subr.mxu0 0.0
      %1213 = vmatpush2.msra.mxu0 0.0
      %1214 = vmatprep.subr.mxu0 0.0
      %1215 = vmatpush2.msra.mxu0 0.0
      %1216 = vmatprep.subr.mxu0 0.0
      %1217 = vmatpush2.msra.mxu0 0.0
      %1218 = vmatprep.subr.mxu0 0.0
      %1219 = vmatpush2.msra.mxu0 0.0
      %1220 = vmatprep.subr.mxu0 0.0
      %1221 = vmatpush2.msra.mxu0 0.0
      %1222 = vmatprep.subr.mxu0 0.0
      %1223 = vmatpush2.msra.mxu0 0.0
      %1224 = vmatprep.mubr.f32.mxu0 0.0
      %1225 = vmatmul.mubr.f32.gmra.mxu0 %v1078
      %v1226 = vpop.f32.mrf.mxu0
      %v1227 = vadd.f32 %v1070, %v1226
      %v1228 = vpop.f32.mrf.mxu0
      %v1229 = vadd.f32 %v1070, %v1228
      %1230 = vmatprep.mubr.f32.mxu0 0.0
      %1231 = vmatmul.mubr.f32.gmra.mxu0 %v1081
      %v1232 = vpop.f32.mrf.mxu0
      %v1233 = vadd.f32 %v1075, %v1232
      %v1234 = vpop.f32.mrf.mxu0
      %v1235 = vadd.f32 %v1075, %v1234
      %1236 = vdwg.mxu0
      %v1237 = vsub.f32 0.0, %v1150
      %v1238 = vsub.f32 0.0, %v1152
      %v1239 = vsub.f32 0.0, %v1227
      %v1240 = vsub.f32 0.0, %v1229
      %v1241 = vsub.f32 0.0, %v1156
      %v1242 = vsub.f32 0.0, %v1158
      %v1243 = vsub.f32 0.0, %v1233
      %v1244 = vsub.f32 0.0, %v1235
      %v1245 = vmul.f32 %v1237, 1.442695
      %v1246 = vpow.pop %v1245
      %v1247 = vmul.f32 %v1238, 1.442695
      %v1248 = vpow.pop %v1247
      %v1249 = vmul.f32 %v1239, 1.442695
      %v1250 = vpow.pop %v1249
      %v1251 = vmul.f32 %v1240, 1.442695
      %v1252 = vpow.pop %v1251
      %v1253 = vmul.f32 %v1241, 1.442695
      %v1254 = vpow.pop %v1253
      %v1255 = vmul.f32 %v1242, 1.442695
      %v1256 = vpow.pop %v1255
      %v1257 = vmul.f32 %v1243, 1.442695
      %v1258 = vpow.pop %v1257
      %v1259 = vmul.f32 %v1244, 1.442695
      %v1260 = vpow.pop %v1259
      %v1261 = vadd.f32 %v1246, 1.0
      %v1262 = vadd.f32 %v1248, 1.0
      %v1263 = vadd.f32 %v1250, 1.0
      %v1264 = vadd.f32 %v1252, 1.0
      %v1265 = vadd.f32 %v1254, 1.0
      %v1266 = vadd.f32 %v1256, 1.0
      %v1267 = vadd.f32 %v1258, 1.0
      %v1268 = vadd.f32 %v1260, 1.0
      %v1269 = vrcp.pop %v1261
      %v1270 = vmul.f32 1.0, %v1269
      %v1271 = vrcp.pop %v1262
      %v1272 = vmul.f32 1.0, %v1271
      %v1273 = vrcp.pop %v1263
      %v1274 = vmul.f32 1.0, %v1273
      %v1275 = vrcp.pop %v1264
      %v1276 = vmul.f32 1.0, %v1275
      %v1277 = vrcp.pop %v1265
      %v1278 = vmul.f32 1.0, %v1277
      %v1279 = vrcp.pop %v1266
      %v1280 = vmul.f32 1.0, %v1279
      %v1281 = vrcp.pop %v1267
      %v1282 = vmul.f32 1.0, %v1281
      %v1283 = vrcp.pop %v1268
      %v1284 = vmul.f32 1.0, %v1283
      %s1285 = smul.addr %s76, 8
      %s1286 = scalar_lea.vmem [#allocation5], %s1285
      %1287 = vst [vmem:[%s1286] sm:$0xff] %v1270
      %1288 = vst [vmem:[%s1286 + $0x8] sm:$0xff] %v1272
      %1289 = vst [vmem:[%s1286 + $0x10] sm:$0xff] %v1274
      %1290 = vst [vmem:[%s1286 + $0x18] sm:$0xff] %v1276
      %1291 = vst [vmem:[%s1286 + $0x40] sm:$0x3] %v1278
      %1292 = vst [vmem:[%s1286 + $0x48] sm:$0x3] %v1280
      %1293 = vst [vmem:[%s1286 + $0x50] sm:$0x3] %v1282
      %1294 = vst [vmem:[%s1286 + $0x58] sm:$0x3] %v1284
    $region22: #{tpu_custom_call.1} parent=1 // loop_footer
      %s74 = sadd.s32 1, %s70
    $region23: #{tpu_custom_call.1} parent=1 // loop_footer_branch
      %69 = sbr.rel target = $region19
    $region24: #{tpu_custom_call.1} parent=1 // loop_exit
      _
    // Predicated region
    $region25: #{tpu_custom_call.1} parent=1 // pred_check
      _
    $region26: #{tpu_custom_call.1} parent=1 // pred_check_branch
      %1296 = sbr.rel (0) target = $region28
    $region27: #{tpu_custom_call.1} parent=1 // pred_region
      %s1298 = ssub.s32 2048, 2048
      %1299 = vsyncadd [#allocation4], %s1298
      %s1300 = sshll.u32 [#allocation5], 4
      %s1301 = int_to_ptr.vmem [resolvable:$true] %s1300
      %1306 = dma.vmem_to_hbm [thread:$0]  %s1301, 2048, %s3, [#allocation4], 1024, 1024, 64
    $region28: #{tpu_custom_call.1} parent=1 // pred_fallthru
      _
    // Predicated region
    $region29: #{tpu_custom_call.1} parent=1 // pred_check
      _
    $region30: #{tpu_custom_call.1} parent=1 // pred_check_branch
      %1308 = sbr.rel (0) target = $region32
    $region31: #{tpu_custom_call.1} parent=1 // pred_region
      %1309 = dma.done [#allocation4], 2048
    $region32: #{tpu_custom_call.1} parent=1 // pred_fallthru
      _
    %1310 = vsyncpa [#allocation3], 1
    %1311 = vsyncpa [#allocation4], 1

</llo_original>
